<compile_context>
chip_gen: v5e
topology: v5e:2x2
jax: 0.10.0
libtpu: 0.0.40
codegen_flags: <defaults>
</compile_context>

<pallas_src>
import jax
import jax.numpy as jnp
from jax.experimental import pallas as pl
from jax.experimental.pallas import tpu as pltpu


def _folded_affine_kernel(x_ref, w_ref, b_ref, o_ref):
    """o = x @ w + b for one (TB, D) batch tile; w is the resident (D,1) column."""
    acc = jnp.dot(x_ref[...], w_ref[...], preferred_element_type=jnp.float32)
    o_ref[...] = (acc + b_ref[0, 0]).astype(o_ref.dtype)


def fold_params(params):
    """Collapse the 5 affine layers (Dropout == identity at eval) into one."""
    w = params["w1"].astype(jnp.float32)              # [D, 1024]
    b = params["b1"].astype(jnp.float32)              # [1, 1024]
    for i in range(2, 6):
        wi = params[f"w{i}"].astype(jnp.float32)
        w = w @ wi
        b = b @ wi + params[f"b{i}"].astype(jnp.float32)
    return w, b                                       # [D, 1], [1, 1]


def _round_up(n, m):
    return ((n + m - 1) // m) * m


def aesthetic_predictor(x, params, *, block_b=2048):
    """x: [B, D] float32. params: dict of (in,out)-layout weights + (1,out) biases."""
    B, D = x.shape
    w_eff, b_eff = fold_params(params)                # done once, outside the kernel

    # Batch tile: multiple of 8 sublanes, large enough to amortize per-step
    # overhead, capped so a single x tile is <= 8 MiB (2x double-buffered
    # <= 16 MiB, comfortably inside the 32 MiB scoped-VMEM limit below).
    max_tile_bytes = 8 * 1024 * 1024
    tb_cap = max(8, ((max_tile_bytes // (D * 4)) // 8) * 8)
    tb = min(_round_up(block_b, 8), tb_cap, _round_up(B, 8))
    grid = pl.cdiv(B, tb)                             # partial last tile allowed

    out = pl.pallas_call(
        _folded_affine_kernel,
        out_shape=jax.ShapeDtypeStruct((B, 1), jnp.float32),
        grid=(grid,),
        in_specs=[
            pl.BlockSpec((tb, D), lambda i: (i, 0)),             # x: streamed tiles
            pl.BlockSpec((D, 1), lambda i: (0, 0)),              # w_eff: VMEM-resident
            pl.BlockSpec(memory_space=pltpu.MemorySpace.SMEM),   # b_eff scalar
        ],
        out_specs=pl.BlockSpec((tb, 1), lambda i: (i, 0)),
        cost_estimate=pl.CostEstimate(
            flops=2 * B * D,
            transcendentals=0,
            bytes_accessed=B * D * 4 + D * 4 + B * 4,
        ),
        compiler_params=pltpu.CompilerParams(
            dimension_semantics=("parallel",),
            vmem_limit_bytes=32 * 1024 * 1024,
        ),
    )(x, w_eff, b_eff)
    return out


def init_params(key, input_size):
    """Deterministic init matching the nn.Linear shapes (weights stored as [in,out])."""
    dims = [(input_size, 1024), (1024, 128), (128, 64), (64, 16), (16, 1)]
    params = {}
    for i, (din, dout) in enumerate(dims, start=1):
        key, kw, kb = jax.random.split(key, 3)
        bound = 1.0 / jnp.sqrt(jnp.float32(din))      # PyTorch default Linear init range
        params[f"w{i}"] = jax.random.uniform(
            kw, (din, dout), jnp.float32, minval=-bound, maxval=bound)
        params[f"b{i}"] = jax.random.uniform(
            kb, (1, dout), jnp.float32, minval=-bound, maxval=bound)
    return params


if __name__ == "__main__":
    B = 2
    INPUT_SIZE = 128   # small stand-in for the 768-d CLIP embedding

    key = jax.random.PRNGKey(0)
    key, kx = jax.random.split(key)
    x = jax.random.normal(kx, (B, INPUT_SIZE), jnp.float32)
    params = init_params(key, INPUT_SIZE)

    out = aesthetic_predictor(x, params)
    jax.block_until_ready(out)

    # Pure-JAX reference of the unfolded 5-layer chain (eval-mode semantics).
    ref = x
    for i in range(1, 6):
        ref = ref @ params[f"w{i}"] + params[f"b{i}"]

    assert out.shape == (B, 1)
    assert jnp.allclose(out, ref, atol=1e-3, rtol=1e-3), float(
        jnp.max(jnp.abs(out - ref)))

    print("KERNEL_OK")
</pallas_src>

<mosaic_0001>
module attributes {stable_mosaic.version = 11 : i64} {
  func.func @_folded_affine_kernel(%arg0: i32, %arg1: memref<8x128xf32, #tpu.memory_space<vmem>>, %arg2: memref<128x1xf32, #tpu.memory_space<vmem>>, %arg3: memref<1x1xf32, #tpu.memory_space<smem>>, %arg4: memref<8x1xf32, #tpu.memory_space<vmem>>) attributes {dimension_semantics = [#tpu.dimension_semantics<parallel>], iteration_bounds = array<i64: 1>, scalar_prefetch = 0 : i64, scratch_operands = 0 : i64, tpu.core_type = #tpu.core_type<tc>, window_params = [{transform_indices = @transform_0, window_bounds = array<i64: 8, 128>}, {pipeline_mode = #tpu.pipeline_mode<synchronous>, transform_indices = @transform_1, window_bounds = array<i64: 128, 1>}, {transform_indices = @transform_2, window_bounds = array<i64: 1, 1>}, {transform_indices = @transform_3, window_bounds = array<i64: 8, 1>}]} {
    %c0 = arith.constant 0 : index
    %c0_0 = arith.constant 0 : index
    %0 = vector.load %arg1[%c0, %c0_0] : memref<8x128xf32, #tpu.memory_space<vmem>>, vector<8x128xf32>
    %c0_1 = arith.constant 0 : index
    %c0_2 = arith.constant 0 : index
    %1 = vector.load %arg2[%c0_1, %c0_2] : memref<128x1xf32, #tpu.memory_space<vmem>>, vector<128x1xf32>
    %cst = arith.constant dense<0.000000e+00> : vector<8x1xf32>
    %2 = tpu.matmul %0, %1, %cst {dimension_numbers = #tpu.dot_dimension_numbers<[1], [0], [0], [1], [0, 0, 1, 1], [], []>} : vector<8x128xf32>, vector<128x1xf32>, vector<8x1xf32> -> vector<8x1xf32>
    %c0_3 = arith.constant 0 : index
    %c0_4 = arith.constant 0 : index
    %3 = memref.load %arg3[%c0_3, %c0_4] : memref<1x1xf32, #tpu.memory_space<smem>>
    %4 = vector.broadcast %3 : f32 to vector<8x1xf32>
    %5 = arith.addf %2, %4 : vector<8x1xf32>
    %c0_5 = arith.constant 0 : index
    %c0_6 = arith.constant 0 : index
    %6 = vector.load %arg4[%c0_5, %c0_6] : memref<8x1xf32, #tpu.memory_space<vmem>>, vector<8x1xf32>
    tpu.vector_store %arg4[%c0_5, %c0_6], %5 {strides = array<i32>} : memref<8x1xf32, #tpu.memory_space<vmem>>, vector<8x1xf32>,
    return
  }
  func.func @transform_0(%arg0: i32) -> (i32, i32) {
    %c0_i32 = arith.constant 0 : i32
    %c0_i32_0 = arith.constant 0 : i32
    return %arg0, %c0_i32 : i32, i32
  }
  func.func @transform_1(%arg0: i32) -> (i32, i32) {
    %c0_i32 = arith.constant 0 : i32
    %c0_i32_0 = arith.constant 0 : i32
    %c0_i32_1 = arith.constant 0 : i32
    return %c0_i32, %c0_i32_0 : i32, i32
  }
  func.func @transform_2(%arg0: i32) -> (i32, i32) {
    %c0_i32 = arith.constant 0 : i32
    %c0_i32_0 = arith.constant 0 : i32
    %c0_i32_1 = arith.constant 0 : i32
    return %c0_i32, %c0_i32_0 : i32, i32
  }
  func.func @transform_3(%arg0: i32) -> (i32, i32) {
    %c0_i32 = arith.constant 0 : i32
    %c0_i32_0 = arith.constant 0 : i32
    return %arg0, %c0_i32 : i32, i32
  }
}

</mosaic_0001>

<llo_original>
// kernel: tpu_custom_call.1
$region0: #{tpu_custom_call.1}
  #allocation0 [shape = 'u32[]', space=smem, size = 0x4, offset = 0x4, fixed_abs, tag = 'smem constant byte address 0x4 - core index']
  #allocation1 [shape = 'u32[72,128]{1,0:T(1,128)}', space=vmem, size = 0x9000, scoped, tag = 'internal scratch']
  #allocation2 [shape = 'f32[1,1]{1,0:T(1,128)S(6)}', space=smem, size = 0x200, scoped, tag = 'scoped memory for tpu_custom_call.1']
  %s0 = inlined_call_operand.vmem [shape: f32[2,128], index: 0, kind: input, shape index: {}]
  %s1 = inlined_call_operand.vmem [shape: f32[128,1], index: 1, kind: input, shape index: {}]
  %s2 = inlined_call_operand.<no memory space> [shape: f32[1,1], index: 2, kind: input, shape index: {}]
  %s3 = inlined_call_operand.vmem [shape: f32[2,1], index: 3, kind: output, shape index: {}]
  %s4 = sld [smem:[#allocation0]]
  $region52: #{tpu_custom_call.1} parent=0
    _
  %s6 = ssub.s32 1, %s4
  %s7 = scalar_select 0, %s6, %s4
  %8 = sst [smem:[#allocation2]] %s2
  $region1: #{tpu_custom_call.1} parent=0
    #allocation3 [shape = 'u8[4096]{0}', space=vmem, size = 0x1000, scoped, tag = 'output window, operand 0, single buffered']
    // Predicated region
    $region2: #{tpu_custom_call.1} parent=1 // pred_check
      _
    $region3: #{tpu_custom_call.1} parent=1 // pred_check_branch
      %10 = sbr.rel (0) target = $region5
    $region4: #{tpu_custom_call.1} parent=1 // pred_region
      _
    $region5: #{tpu_custom_call.1} parent=1 // pred_fallthru
      _
    // Predicated region
    $region6: #{tpu_custom_call.1} parent=1 // pred_check
      _
    $region7: #{tpu_custom_call.1} parent=1 // pred_check_branch
      %12 = sbr.rel (0) target = $region9
    $region8: #{tpu_custom_call.1} parent=1 // pred_region
      _
    $region9: #{tpu_custom_call.1} parent=1 // pred_fallthru
      _
    // Predicated region
    $region10: #{tpu_custom_call.1} parent=1 // pred_check
      _
    $region11: #{tpu_custom_call.1} parent=1 // pred_check_branch
      %14 = sbr.rel (0) target = $region13
    $region12: #{tpu_custom_call.1} parent=1 // pred_region
      _
    $region13: #{tpu_custom_call.1} parent=1 // pred_fallthru
      _
    %v15 = vld [vmem:[%s0] sm:$0xff]
    %v16 = vld [vmem:[%s1] sm:$0xff]
    %v17 = vld [vmem:[%s1 + $0x8] sm:$0xff]
    %v18 = vld [vmem:[%s1 + $0x10] sm:$0xff]
    %v19 = vld [vmem:[%s1 + $0x18] sm:$0xff]
    %v20 = vld [vmem:[%s1 + $0x20] sm:$0xff]
    %v21 = vld [vmem:[%s1 + $0x28] sm:$0xff]
    %v22 = vld [vmem:[%s1 + $0x30] sm:$0xff]
    %v23 = vld [vmem:[%s1 + $0x38] sm:$0xff]
    %v24 = vld [vmem:[%s1 + $0x40] sm:$0xff]
    %v25 = vld [vmem:[%s1 + $0x48] sm:$0xff]
    %v26 = vld [vmem:[%s1 + $0x50] sm:$0xff]
    %v27 = vld [vmem:[%s1 + $0x58] sm:$0xff]
    %v28 = vld [vmem:[%s1 + $0x60] sm:$0xff]
    %v29 = vld [vmem:[%s1 + $0x68] sm:$0xff]
    %v30 = vld [vmem:[%s1 + $0x70] sm:$0xff]
    %v31 = vld [vmem:[%s1 + $0x78] sm:$0xff]
    %s32 = sld [smem:[#allocation2]]
    %v33 = vstv %s32
    %34 = vmatpush.msra.mxu0 %v31
    %35 = vmatpush.msra.mxu0 %v30
    %36 = vmatpush.msra.mxu0 %v29
    %37 = vmatpush.msra.mxu0 %v28
    %38 = vmatpush.msra.mxu0 %v27
    %39 = vmatpush.msra.mxu0 %v26
    %40 = vmatpush.msra.mxu0 %v25
    %41 = vmatpush.msra.mxu0 %v24
    %42 = vmatpush.msra.mxu0 %v23
    %43 = vmatpush.msra.mxu0 %v22
    %44 = vmatpush.msra.mxu0 %v21
    %45 = vmatpush.msra.mxu0 %v20
    %46 = vmatpush.msra.mxu0 %v19
    %47 = vmatpush.msra.mxu0 %v18
    %48 = vmatpush.msra.mxu0 %v17
    %49 = vmatpush.msra.mxu0 %v16
    %50 = vmatmul.f32.gmra.mxu0 %v15
    %v51 = vpop.f32.mrf.mxu0
    %v52 = vadd.f32 %v33, %v51
    %53 = vdwg.mxu0
    %vm54 = vcmask 7168
    %55 = vst.msk [vmem:[#allocation3] sm:$0xff] %vm54, %v52
    // Predicated region
    $region14: #{tpu_custom_call.1} parent=1 // pred_check
      _
    $region15: #{tpu_custom_call.1} parent=1 // pred_check_branch
      %57 = sbr.rel (0) target = $region17
    $region16: #{tpu_custom_call.1} parent=1 // pred_region
      // Predicated region
      $region18: #{tpu_custom_call.1} parent=16 // pred_check
        _
      $region19: #{tpu_custom_call.1} parent=16 // pred_check_branch
        %59 = sbr.rel (0) target = $region21
      $region20: #{tpu_custom_call.1} parent=16 // pred_region
        // Predicated region
        $region22: #{tpu_custom_call.1} parent=20 // pred_check
          _
        $region23: #{tpu_custom_call.1} parent=20 // pred_check_branch
          %61 = sbr.rel target = $region25
        $region24: #{tpu_custom_call.1} parent=20 // pred_region
          // Predicated region
          $region37: #{tpu_custom_call.1} parent=24 // pred_check
            _
          $region38: #{tpu_custom_call.1} parent=24 // pred_check_branch
            %77 = sbr.rel (0) target = $region40
          $region39: #{tpu_custom_call.1} parent=24 // pred_region
            %s79 = ssub.s32 4, 1
            loop: start=0, step=1, limit=1
            $region41: #{tpu_custom_call.1} parent=39 // loop_pre_header
              _
            $region42: #{tpu_custom_call.1} parent=39 // loop_header
              %s81 = sphi 0, %s85
              %p82 = scmp.ge.s32.totalorder %s81, 1
              %s86 = sphi [#allocation3], [#allocation3]
              %s87 = sphi %s3, %s3
            $region43: #{tpu_custom_call.1} parent=39 // loop_header_branch
              %84 = sbr.rel (%p82) target = $region47
            $region44: #{tpu_custom_call.1} parent=39 // loop_body
              %v88 = vld [vmem:[%s86] sm:%s79]
              %89 = vst [vmem:[%s87] sm:%s79] %v88
            $region45: #{tpu_custom_call.1} parent=39 // loop_footer
              %s85 = sadd.s32 1, %s81
            $region46: #{tpu_custom_call.1} parent=39 // loop_footer_branch
              %80 = sbr.rel target = $region42
            $region47: #{tpu_custom_call.1} parent=39 // loop_exit
              _
          $region40: #{tpu_custom_call.1} parent=24 // pred_fallthru
            _
        $region25: #{tpu_custom_call.1} parent=20 // pred_fallthru
          _
        // Predicated region
        $region26: #{tpu_custom_call.1} parent=20 // pred_check
          _
        $region27: #{tpu_custom_call.1} parent=20 // pred_check_branch
          %63 = sbr.rel (0) target = $region29
        $region28: #{tpu_custom_call.1} parent=20 // pred_region
          %s65 = ssub.s32 4, 1
          loop: start=0, step=1, limit=1
          $region30: #{tpu_custom_call.1} parent=28 // loop_pre_header
            _
          $region31: #{tpu_custom_call.1} parent=28 // loop_header
            %s67 = sphi 0, %s71
            %p68 = scmp.ge.s32.totalorder %s67, 1
            %s72 = sphi [#allocation3], [#allocation3]
            %s73 = sphi %s3, %s3
          $region32: #{tpu_custom_call.1} parent=28 // loop_header_branch
            %70 = sbr.rel (%p68) target = $region36
          $region33: #{tpu_custom_call.1} parent=28 // loop_body
            %v74 = vld [vmem:[%s72] sm:%s65]
            %75 = vst [vmem:[%s73] sm:%s65] %v74
          $region34: #{tpu_custom_call.1} parent=28 // loop_footer
            %s71 = sadd.s32 1, %s67
          $region35: #{tpu_custom_call.1} parent=28 // loop_footer_branch
            %66 = sbr.rel target = $region31
          $region36: #{tpu_custom_call.1} parent=28 // loop_exit
            _
        $region29: #{tpu_custom_call.1} parent=20 // pred_fallthru
          _
      $region21: #{tpu_custom_call.1} parent=16 // pred_fallthru
        _
      %90 = vnop
    $region17: #{tpu_custom_call.1} parent=1 // pred_fallthru
      _
    // Predicated region
    $region48: #{tpu_custom_call.1} parent=1 // pred_check
      _
    $region49: #{tpu_custom_call.1} parent=1 // pred_check_branch
      %92 = sbr.rel (0) target = $region51
    $region50: #{tpu_custom_call.1} parent=1 // pred_region
      _
    $region51: #{tpu_custom_call.1} parent=1 // pred_fallthru
      _

</llo_original>
